<compile_context>
chip_gen: v6e
topology: v6e:2x2x1
jax: 0.10.0
libtpu: 0.0.40
codegen_flags: <defaults>
</compile_context>

<pallas_src>
import jax
import jax.numpy as jnp
from jax.experimental import pallas as pl
from jax.experimental.pallas import tpu as pltpu

_TARGET_BLOCK_BYTES = 4 * 1024 * 1024   # ~4 MiB input tile (~16 MiB dbl-buffered)
_VMEM_LIMIT_BYTES = 32 * 1024 * 1024    # explicit scoped-VMEM budget (all gens)
_MIN_GRID = 4                           # let both v7x TensorCores get work


def _silu_pow2_kernel(params_ref, x_ref, o_ref):
    """Elementwise hot path of NewAct.forward (dequant folded into coeffs).

    params (f32 SMEM, length 6):
      [0] 2^n1          pre-quant scale
      [1] 2^(2+n1)      quadratic shift
      [2] 2^-(3n1+5)    quadratic coefficient (n2 cancelled by dequant)
      [3] 2^(2n1+5)     quadratic offset
      [4] 4*2^n1        linear-region threshold
      [5] 2^-n1         linear-region slope (n2 cancelled by dequant)
    """
    # Load in native dtype, do the math in f32 in-register.
    x = jnp.maximum(x_ref[...].astype(jnp.float32), -4.0)  # clamp_values=(-4, None)

    scale1 = params_ref[0]
    c_shift = params_ref[1]
    a_coef = params_ref[2]
    b_coef = params_ref[3]
    thr = params_ref[4]
    lin_coef = params_ref[5]

    # pre_activation_quantizer.quantizer.quantize(x).  The clip to [-128,127]
    # is a no-op here: abs-max pow2 calibration guarantees |x*2^n1| <= 127.
    xq = jnp.round(x * scale1)

    # Piecewise-quadratic SiLU approximation, already dequantized:
    #   xq <= 0         : a * (xq - c)^2 * xq
    #   0 < xq <= thr   : a * (b - (xq - c)^2) * xq
    #   xq > thr        : xq * 2^-n1
    d = xq - c_shift
    t = d * d
    sel = jnp.where(xq <= 0.0, t, b_coef - t)
    out = (a_coef * xq) * sel
    out = jnp.where(xq > thr, xq * lin_coef, out)

    o_ref[...] = out.astype(o_ref.dtype)


def _pack_params(n1):
    return jnp.stack([
        jnp.exp2(n1),                   # scale1
        jnp.exp2(2.0 + n1),             # c_shift
        jnp.exp2(-(3.0 * n1 + 5.0)),    # a_coef  (n2 cancelled)
        jnp.exp2(2.0 * n1 + 5.0),       # b_coef
        4.0 * jnp.exp2(n1),             # thr
        jnp.exp2(-n1),                  # lin_coef (n2 cancelled)
    ]).astype(jnp.float32)


def _choose_lanes(n):
    """Largest lane width in {1024,512,256,128} dividing n; prefer one that
    also makes the row count a multiple of 8 (nice tiling for small tensors)."""
    for cand in (1024, 512, 256, 128):
        if n % cand == 0 and (n // cand) % 8 == 0:
            return cand
    for cand in (1024, 512, 256, 128):
        if n % cand == 0:
            return cand
    return None


def _choose_tiling(rows, lanes, itemsize):
    """Pick (block_rows, grid) with block_rows a multiple of 8 (or == rows).

    Uses a cdiv grid with a ragged, Pallas-masked final block, so block_rows
    never needs to divide rows exactly (no degenerate 8-row divisor search)."""
    if rows < 8:
        return rows, 1                               # full-dim block is legal
    target_rows = max(8, (_TARGET_BLOCK_BYTES // (itemsize * lanes)) // 8 * 8)
    block_rows = min(target_rows, (rows // 8) * 8)
    # Cap so the "parallel" grid has >= _MIN_GRID steps when there is enough
    # work (v7x megacore sharding); harmless on single-TC chips.
    cap = (rows // _MIN_GRID) // 8 * 8
    if cap >= 8:
        block_rows = min(block_rows, cap)
    return block_rows, pl.cdiv(rows, block_rows)


def new_act_forward(x):
    orig_shape = x.shape
    orig_dtype = x.dtype

    # Pre-quantizer pow2 abs-max calibration.  Runs on x directly; XLA fuses
    # the convert+clamp+abs into the reduction (no f32 HBM copy).
    x_cl = jnp.maximum(x.astype(jnp.float32), -4.0)
    max_abs = jnp.maximum(jnp.max(jnp.abs(x_cl)), 1e-8)
    n1 = jnp.floor(jnp.log2(127.0 / max_abs))
    params = _pack_params(n1)

    flat = x.reshape(-1)
    n = flat.shape[0]

    lanes = _choose_lanes(n)
    pad = 0
    if lanes is None:
        # TODO(synk): rare path (element count not a multiple of 128) still
        # pays a pad + slice copy; conv activations never hit it.
        lanes = 128
        pad = (-n) % (8 * lanes)
        flat = jnp.pad(flat, (0, pad))

    rows = flat.shape[0] // lanes
    x2d = flat.reshape(rows, lanes)          # free: contiguous row-major view

    block_rows, grid = _choose_tiling(rows, lanes, x2d.dtype.itemsize)

    out2d = pl.pallas_call(
        _silu_pow2_kernel,
        out_shape=jax.ShapeDtypeStruct((rows, lanes), orig_dtype),
        grid=(grid,),
        in_specs=[
            pl.BlockSpec(memory_space=pltpu.MemorySpace.SMEM),   # params (whole)
            pl.BlockSpec((block_rows, lanes), lambda i: (i, 0)),  # x tile
        ],
        out_specs=pl.BlockSpec((block_rows, lanes), lambda i: (i, 0)),
        compiler_params=pltpu.CompilerParams(
            dimension_semantics=("parallel",),
            vmem_limit_bytes=_VMEM_LIMIT_BYTES,
        ),
    )(params, x2d)

    if pad:
        return out2d.reshape(-1)[:n].reshape(orig_shape)
    return out2d.reshape(orig_shape)


def _reference(x):
    """Pure-JAX reference of the ORIGINAL forward math (with n2/z2), used to
    verify that folding the dequant (n2/z2 cancellation), dropping the fake
    pass, and dropping the redundant clip are numerically exact."""
    xf = x.astype(jnp.float32)
    bit = 8
    qmax = 2.0 ** (bit - 1) - 1.0   # 127
    qmin = -(qmax + 1.0)            # -128

    xc = jnp.maximum(xf, -4.0)
    max_abs = jnp.maximum(jnp.max(jnp.abs(xc)), 1e-8)
    n1 = jnp.floor(jnp.log2(qmax / max_abs))

    # "fake pass": calibrate post-quantizer (n2, z2) from the approx output.
    xq = jnp.clip(jnp.round(xc * jnp.exp2(n1)), qmin, qmax)
    xdq = xq * jnp.exp2(-n1)
    sig = jnp.where(xdq <= 0.0, (xdq + 4.0) ** 2 / 32.0,
                    1.0 - (4.0 - xdq) ** 2 / 32.0)
    sig = jnp.where(xdq > 4.0, 1.0, sig)
    fake_out = xdq * sig
    f_min = jnp.min(fake_out)
    f_max = jnp.max(fake_out)
    rng = jnp.maximum(f_max - f_min, 1e-8)
    n2 = jnp.floor(jnp.log2((2.0 ** bit - 1.0) / rng))
    z2 = jnp.round(qmin - f_min * jnp.exp2(n2))

    # forward math exactly as in the PyTorch module
    t = (xq - jnp.exp2(2.0 + n1)) ** 2
    a = jnp.exp2(n2 - (3.0 * n1 + 5.0))
    x_out1 = a * t * xq + z2
    x_out2 = a * (jnp.exp2(2.0 * n1 + 5.0) - t) * xq + z2
    x_out = jnp.where(xq <= 0.0, x_out1, x_out2)
    x_out = jnp.where(xq > 4.0 * jnp.exp2(n1), xq * jnp.exp2(n2 - n1) + z2, x_out)
    return (x_out - z2) * jnp.exp2(-n2)


if __name__ == "__main__":
    fwd = jax.jit(new_act_forward)

    key = jax.random.PRNGKey(0)
    k0, k1 = jax.random.split(key)

    # Main NCHW f32 case (as a PyTorch conv activation would be).
    x = jax.random.normal(k0, (2, 4, 16, 16), dtype=jnp.float32) * 3.0
    y = jax.block_until_ready(fwd(x))
    y_ref = _reference(x)
    assert y.shape == x.shape and y.dtype == x.dtype
    assert jnp.allclose(y, y_ref, atol=1e-4, rtol=1e-4)

    # Awkward shape: exercises the ragged (masked) final block path.
    x2 = jax.random.normal(k1, (3, 5, 16, 24), dtype=jnp.float32) * 2.0
    y2 = jax.block_until_ready(fwd(x2))
    y2_ref = _reference(x2)
    assert y2.shape == x2.shape
    assert jnp.allclose(y2, y2_ref, atol=1e-4, rtol=1e-4)

    # bf16 activation: native-dtype I/O, f32 math in-register.
    xb = x.astype(jnp.bfloat16)
    yb = jax.block_until_ready(fwd(xb))
    yb_ref = _reference(xb.astype(jnp.float32))
    assert yb.dtype == jnp.bfloat16
    assert jnp.allclose(yb.astype(jnp.float32), yb_ref, atol=2e-2, rtol=1e-2)

    print("KERNEL_OK")
</pallas_src>

<mosaic_0001>
module attributes {stable_mosaic.version = 11 : i64} {
  func.func @_silu_pow2_kernel(%arg0: i32, %arg1: memref<6xf32, #tpu.memory_space<smem>>, %arg2: memref<8x256xf32, #tpu.memory_space<vmem>>, %arg3: memref<8x256xf32, #tpu.memory_space<vmem>>) attributes {dimension_semantics = [#tpu.dimension_semantics<parallel>], iteration_bounds = array<i64: 1>, scalar_prefetch = 0 : i64, scratch_operands = 0 : i64, tpu.core_type = #tpu.core_type<tc>, window_params = [{transform_indices = @transform_0, window_bounds = array<i64: 6>}, {transform_indices = @transform_1, window_bounds = array<i64: 8, 256>}, {transform_indices = @transform_2, window_bounds = array<i64: 8, 256>}]} {
    %c0 = arith.constant 0 : index
    %c0_0 = arith.constant 0 : index
    %0 = vector.load %arg2[%c0, %c0_0] : memref<8x256xf32, #tpu.memory_space<vmem>>, vector<8x256xf32>
    %cst = arith.constant -4.000000e+00 : f32
    %1 = vector.broadcast %cst : f32 to vector<8x256xf32>
    %2 = arith.maximumf %0, %1 : vector<8x256xf32>
    %c0_1 = arith.constant 0 : index
    %3 = memref.load %arg1[%c0_1] : memref<6xf32, #tpu.memory_space<smem>>
    %c1 = arith.constant 1 : index
    %4 = memref.load %arg1[%c1] : memref<6xf32, #tpu.memory_space<smem>>
    %c2 = arith.constant 2 : index
    %5 = memref.load %arg1[%c2] : memref<6xf32, #tpu.memory_space<smem>>
    %c3 = arith.constant 3 : index
    %6 = memref.load %arg1[%c3] : memref<6xf32, #tpu.memory_space<smem>>
    %c4 = arith.constant 4 : index
    %7 = memref.load %arg1[%c4] : memref<6xf32, #tpu.memory_space<smem>>
    %c5 = arith.constant 5 : index
    %8 = memref.load %arg1[%c5] : memref<6xf32, #tpu.memory_space<smem>>
    %9 = vector.broadcast %3 : f32 to vector<8x256xf32>
    %10 = arith.mulf %2, %9 : vector<8x256xf32>
    %11 = math.roundeven %10 : vector<8x256xf32>
    %12 = vector.broadcast %4 : f32 to vector<8x256xf32>
    %13 = arith.subf %11, %12 : vector<8x256xf32>
    %14 = arith.mulf %13, %13 : vector<8x256xf32>
    %cst_2 = arith.constant 0.000000e+00 : f32
    %15 = vector.broadcast %cst_2 : f32 to vector<8x256xf32>
    %16 = arith.cmpf ole, %11, %15 : vector<8x256xf32>
    %17 = vector.broadcast %6 : f32 to vector<8x256xf32>
    %18 = arith.subf %17, %14 : vector<8x256xf32>
    %19 = arith.select %16, %14, %18 : vector<8x256xi1>, vector<8x256xf32>
    %20 = vector.broadcast %5 : f32 to vector<8x256xf32>
    %21 = arith.mulf %20, %11 : vector<8x256xf32>
    %22 = arith.mulf %21, %19 : vector<8x256xf32>
    %23 = vector.broadcast %7 : f32 to vector<8x256xf32>
    %24 = arith.cmpf ogt, %11, %23 : vector<8x256xf32>
    %25 = vector.broadcast %8 : f32 to vector<8x256xf32>
    %26 = arith.mulf %11, %25 : vector<8x256xf32>
    %27 = arith.select %24, %26, %22 : vector<8x256xi1>, vector<8x256xf32>
    %c0_3 = arith.constant 0 : index
    %c0_4 = arith.constant 0 : index
    %28 = vector.load %arg3[%c0_3, %c0_4] : memref<8x256xf32, #tpu.memory_space<vmem>>, vector<8x256xf32>
    tpu.vector_store %arg3[%c0_3, %c0_4], %27 {strides = array<i32>} : memref<8x256xf32, #tpu.memory_space<vmem>>, vector<8x256xf32>,
    return
  }
  func.func @transform_0(%arg0: i32) -> i32 {
    %c0_i32 = arith.constant 0 : i32
    %c0_i32_0 = arith.constant 0 : i32
    return %c0_i32 : i32
  }
  func.func @transform_1(%arg0: i32) -> (i32, i32) {
    %c0_i32 = arith.constant 0 : i32
    %c0_i32_0 = arith.constant 0 : i32
    return %arg0, %c0_i32 : i32, i32
  }
  func.func @transform_2(%arg0: i32) -> (i32, i32) {
    %c0_i32 = arith.constant 0 : i32
    %c0_i32_0 = arith.constant 0 : i32
    return %arg0, %c0_i32 : i32, i32
  }
}

</mosaic_0001>

<llo_original>
// kernel: new_act_forward.1
$region0: #{new_act_forward.1}
  #allocation0 [shape = 'u32[]', space=smem, size = 0x4, offset = 0x4, fixed_abs, tag = 'smem constant byte address 0x4 - core index']
  #allocation1 [shape = 'u32[144,128]{1,0:T(1,128)}', space=vmem, size = 0x12000, scoped, tag = 'internal scratch']
  %s0 = inlined_call_operand.vmem [shape: f32[6], index: 0, kind: input, shape index: {}]
  %s1 = inlined_call_operand.vmem [shape: f32[8,256], index: 1, kind: input, shape index: {}]
  %s2 = inlined_call_operand.vmem [shape: f32[8,256], index: 2, kind: output, shape index: {}]
  %s3 = sld [smem:[#allocation0]]
  $region22: #{new_act_forward.1} parent=0
    _
  %s5 = ssub.s32 1, %s3
  %s6 = scalar_select 0, %s5, %s3
  $region1: #{new_act_forward.1} parent=0
    #allocation2 [shape = 'u8[512]{0}', space=smem, size = 0x200, scoped, tag = 'input window, operand 0, single buffered']
    #allocation3 [shape = 's32[1]{0}', space=sflag, size = 0x4, scoped, tag = 'scoped memory for new_act_forward.1']
    %7 = vsyncpa [#allocation3], 0
    // Predicated region
    $region2: #{new_act_forward.1} parent=1 // pred_check
      _
    $region3: #{new_act_forward.1} parent=1 // pred_check_branch
      %9 = sbr.rel (0) target = $region5
    $region4: #{new_act_forward.1} parent=1 // pred_region
      %s11 = ssub.s32 16, 16
      %12 = vsyncadd [#allocation3], %s11
      %s14 = sshll.u32 %s0, 4
      %s15 = int_to_ptr.vmem [resolvable:$true] %s14
      %17 = dma.vmem_to_smem %s15, 16, [#allocation2], [#allocation3]
    $region5: #{new_act_forward.1} parent=1 // pred_fallthru
      _
    // Predicated region
    $region6: #{new_act_forward.1} parent=1 // pred_check
      _
    $region7: #{new_act_forward.1} parent=1 // pred_check_branch
      %19 = sbr.rel (0) target = $region9
    $region8: #{new_act_forward.1} parent=1 // pred_region
      _
    $region9: #{new_act_forward.1} parent=1 // pred_fallthru
      _
    // Predicated region
    $region10: #{new_act_forward.1} parent=1 // pred_check
      _
    $region11: #{new_act_forward.1} parent=1 // pred_check_branch
      %21 = sbr.rel (0) target = $region13
    $region12: #{new_act_forward.1} parent=1 // pred_region
      %22 = dma.done [#allocation3], 16
    $region13: #{new_act_forward.1} parent=1 // pred_fallthru
      _
    %23 = sfence
    %v24 = vld [vmem:[%s1] sm:$0xff]
    %v25 = vld [vmem:[%s1 + $0x8] sm:$0xff]
    %v26 = vmax.f32 %v24, -4.0
    %v27 = vmax.f32 %v25, -4.0
    %s28 = sld [smem:[#allocation2]]
    %s29 = sld [smem:[#allocation2 + $0x1]]
    %s30 = sld [smem:[#allocation2 + $0x2]]
    %s31 = sld [smem:[#allocation2 + $0x3]]
    %s32 = sld [smem:[#allocation2 + $0x4]]
    %s33 = sld [smem:[#allocation2 + $0x5]]
    %v34 = vstv %s28
    %v35 = vmul.f32 %v26, %v34
    %v36 = vmul.f32 %v27, %v34
    %v37 = vround.ne.pseudo %v35
    %v38 = vround.ne.pseudo %v36
    %v39 = vstv %s29
    %v40 = vsub.f32 %v37, %v39
    %v41 = vsub.f32 %v38, %v39
    %v42 = vmul.f32 %v40, %v40
    %v43 = vmul.f32 %v41, %v41
    %vm44 = vcmp.le.f32.partialorder %v37, 0.0
    %vm45 = vcmp.le.f32.partialorder %v38, 0.0
    %v46 = vstv %s31
    %v47 = vsub.f32 %v46, %v42
    %v48 = vsub.f32 %v46, %v43
    %v49 = vsel %vm44, %v42, %v47
    %v50 = vsel %vm45, %v43, %v48
    %v51 = vstv %s30
    %v52 = vmul.f32 %v51, %v37
    %v53 = vmul.f32 %v51, %v38
    %v54 = vmul.f32 %v52, %v49
    %v55 = vmul.f32 %v53, %v50
    %v56 = vstv %s32
    %vm57 = vcmp.gt.f32.partialorder %v37, %v56
    %vm58 = vcmp.gt.f32.partialorder %v38, %v56
    %v59 = vstv %s33
    %v60 = vmul.f32 %v37, %v59
    %v61 = vmul.f32 %v38, %v59
    %v62 = vsel %vm57, %v60, %v54
    %v63 = vsel %vm58, %v61, %v55
    %64 = vst [vmem:[%s2] sm:$0xff] %v62
    %65 = vst [vmem:[%s2 + $0x8] sm:$0xff] %v63
    // Predicated region
    $region14: #{new_act_forward.1} parent=1 // pred_check
      _
    $region15: #{new_act_forward.1} parent=1 // pred_check_branch
      %67 = sbr.rel (0) target = $region17
    $region16: #{new_act_forward.1} parent=1 // pred_region
      _
    $region17: #{new_act_forward.1} parent=1 // pred_fallthru
      _
    // Predicated region
    $region18: #{new_act_forward.1} parent=1 // pred_check
      _
    $region19: #{new_act_forward.1} parent=1 // pred_check_branch
      %69 = sbr.rel (0) target = $region21
    $region20: #{new_act_forward.1} parent=1 // pred_region
      _
    $region21: #{new_act_forward.1} parent=1 // pred_fallthru
      _
    %70 = vsyncpa [#allocation3], 1

</llo_original>
